<compile_context>
chip_gen: v5e
topology: v5e:2x2
jax: 0.10.0
libtpu: 0.0.40
codegen_flags: <defaults>
</compile_context>

<pallas_src>
import math
import functools

import jax
import jax.numpy as jnp
from jax.experimental import pallas as pl
from jax.experimental.pallas import tpu as pltpu


def _self_attention_kernel(x_ref, wqkv_ref, wo_ref, bo_ref, o_ref,
                           qkv_scratch, ctx_scratch,
                           *, num_heads, head_dim, approx_recip):
    # x_ref: (1, S, D) bf16; wqkv: (D, 3D) bf16 (scale folded into W_q columns);
    # wo: (D, D) bf16; bo: (1, D) f32; scratches: (S, 3D) bf16, (S, D) bf16.
    S = x_ref.shape[1]
    D = x_ref.shape[2]

    x = x_ref[0]                                                 # (S, D) bf16

    # ---- fused QKV projection: a single MXU matmul with N = 3D ----
    qkv = jnp.dot(x, wqkv_ref[...],
                  preferred_element_type=jnp.float32)            # (S, 3D) f32
    qkv_scratch[...] = qkv.astype(jnp.bfloat16)                  # bf16 residency

    def attend_one_head(off):
        qh = qkv_scratch[:, pl.ds(off, head_dim)]                # (S, hd) bf16
        kh = qkv_scratch[:, pl.ds(D + off, head_dim)]
        vh = qkv_scratch[:, pl.ds(2 * D + off, head_dim)]

        # contraction over head_dim; K "transpose" fused into dot_general
        s = jnp.einsum('qd,kd->qk', qh, kh,
                       preferred_element_type=jnp.float32)       # (S, S) f32
        s = s - jnp.max(s, axis=-1, keepdims=True)
        p = jnp.exp(s)                                           # f32 (see TODO)
        denom = jnp.sum(p, axis=-1, keepdims=True)               # (S, 1) f32

        # PV matmul on unnormalized probabilities, then normalize the (S, hd)
        # context (S*hd VALU ops instead of S*S); reciprocal on the free EUP slot.
        ctx = jnp.dot(p.astype(jnp.bfloat16), vh,
                      preferred_element_type=jnp.float32)        # (S, hd) f32
        ctx = ctx * pl.reciprocal(denom, approx=approx_recip)

        # scatter this head's context at its column offset (no concat, no
        # per-head W_o matmul).
        ctx_scratch[:, pl.ds(off, head_dim)] = ctx.astype(jnp.bfloat16)

    if head_dim % 128 == 0:
        # Lane-aligned head slices: dynamic loop bounds per-head live ranges
        # (important for H >= 8), small unroll keeps the LLO scheduler fed.
        def body(h, carry):
            attend_one_head(pl.multiple_of(h * head_dim, head_dim))
            return carry
        jax.lax.fori_loop(0, num_heads, body, 0, unroll=2)
    else:
        # Sub-128 head widths (e.g. the test shape): static offsets keep the
        # slices as cheap masked accesses instead of dynamic lane shuffles.
        for h in range(num_heads):
            attend_one_head(h * head_dim)

    # ---- single fused output projection: full K = D MXU contraction ----
    proj = jnp.dot(ctx_scratch[...], wo_ref[...],
                   preferred_element_type=jnp.float32)           # (S, D) f32
    o_ref[0] = (proj + bo_ref[...]).astype(o_ref.dtype)


def _vmem_limit_bytes():
    """Generation-aware VMEM limit with headroom (fallback if query fails)."""
    try:
        cap = int(pltpu.get_tpu_info().vmem_capacity_bytes)
    except Exception:
        cap = 64 * 1024 * 1024
    return max(32 * 1024 * 1024, min((cap * 3) // 4, 100 * 1024 * 1024))


def fuse_attention_weights(wq, wk, wv, wo, bo, *, num_heads):
    """One-time weight transform (hoist out of the per-call path).

    Weights are laid out so the kernel computes y = x @ W (== x @ W_pt.T).
    The 1/sqrt(head_dim) softmax scale is folded into the W_q columns.
    """
    D = wq.shape[0]
    assert D % num_heads == 0, "input_dim must be divisible by num_heads"
    head_dim = D // num_heads
    scale = 1.0 / math.sqrt(float(head_dim))
    wqkv = jnp.concatenate([wq * scale, wk, wv], axis=1).astype(jnp.bfloat16)
    return wqkv, wo.astype(jnp.bfloat16), bo.astype(jnp.float32)


def self_attention(x, wqkv, wo_bf16, bo_f32, *, num_heads,
                   approx_softmax_recip=True):
    """x: (B, S, D) float32; wqkv/wo pre-fused/pre-cast via fuse_attention_weights."""
    B, S, D = x.shape
    assert D % num_heads == 0, "input_dim must be divisible by num_heads"
    head_dim = D // num_heads

    # pre-cast activations once: halves x HBM->VMEM traffic, no in-kernel cast
    x_bf16 = x.astype(jnp.bfloat16)

    kernel = functools.partial(_self_attention_kernel,
                               num_heads=num_heads, head_dim=head_dim,
                               approx_recip=approx_softmax_recip)

    return pl.pallas_call(
        kernel,
        out_shape=jax.ShapeDtypeStruct((B, S, D), x.dtype),
        grid=(B,),
        in_specs=[
            pl.BlockSpec((1, S, D), lambda b: (b, 0, 0)),        # x: one batch / step
            pl.BlockSpec((D, 3 * D), lambda b: (0, 0)),          # W_qkv (bf16, resident)
            pl.BlockSpec((D, D), lambda b: (0, 0)),              # W_o   (bf16, resident)
            pl.BlockSpec((1, D), lambda b: (0, 0)),              # b_o   (f32)
        ],
        out_specs=pl.BlockSpec((1, S, D), lambda b: (b, 0, 0)),
        scratch_shapes=[
            pltpu.VMEM((S, 3 * D), jnp.bfloat16),                # bf16 qkv residency
            pltpu.VMEM((S, D), jnp.bfloat16),                    # per-head ctx scatter
        ],
        compiler_params=pltpu.CompilerParams(
            dimension_semantics=("parallel",),                   # shard batch over TCs
            vmem_limit_bytes=_vmem_limit_bytes()),
    )(x_bf16, wqkv, wo_bf16, bo_f32)


def reference_self_attention(x, wq, wk, wv, wo, bo, *, num_heads):
    """Plain-JAX f32 reference mirroring the PyTorch forward (dropout = identity)."""
    B, S, D = x.shape
    hd = D // num_heads
    q = x @ wq
    k = x @ wk
    v = x @ wv
    q = q.reshape(B, S, num_heads, hd).transpose(0, 2, 1, 3)
    k = k.reshape(B, S, num_heads, hd).transpose(0, 2, 1, 3)
    v = v.reshape(B, S, num_heads, hd).transpose(0, 2, 1, 3)
    scores = jnp.einsum("bhqd,bhkd->bhqk", q, k) / jnp.sqrt(jnp.float32(hd))
    p = jax.nn.softmax(scores, axis=-1)
    out = jnp.einsum("bhqk,bhkd->bhqd", p, v)
    out = out.transpose(0, 2, 1, 3).reshape(B, S, D)
    return out @ wo + bo[0]


if __name__ == "__main__":
    B, S, D, H = 2, 8, 32, 4   # batch, seq, input_dim, num_heads (head_dim = 8)

    key = jax.random.PRNGKey(0)
    kx, kq, kk, kv, ko, kb = jax.random.split(key, 6)

    x = jax.random.normal(kx, (B, S, D), dtype=jnp.float32)

    # nn.Linear(input_dim, input_dim) weights are (out, in); pass pre-transposed
    # so the kernel computes x @ W.
    scale = 1.0 / math.sqrt(D)
    wq = (jax.random.uniform(kq, (D, D), jnp.float32, -scale, scale)).T
    wk = (jax.random.uniform(kk, (D, D), jnp.float32, -scale, scale)).T
    wv = (jax.random.uniform(kv, (D, D), jnp.float32, -scale, scale)).T
    wo = (jax.random.uniform(ko, (D, D), jnp.float32, -scale, scale)).T
    bo = jax.random.uniform(kb, (1, D), jnp.float32, -scale, scale)

    # one-time weight fusion / cast (hoisted out of the per-call path)
    wqkv, wo_bf, bo_f = fuse_attention_weights(wq, wk, wv, wo, bo, num_heads=H)

    out = self_attention(x, wqkv, wo_bf, bo_f, num_heads=H)
    out = jax.block_until_ready(out)

    ref = reference_self_attention(x, wq, wk, wv, wo, bo, num_heads=H)
    assert out.shape == (B, S, D)
    # tolerance relaxed vs. a pure-f32 version: matmul operands are bf16
    # (f32 accumulation) and the softmax denominator uses the approximate
    # EUP reciprocal (set approx_softmax_recip=False for the exact divide).
    assert jnp.allclose(out, ref, atol=2e-2, rtol=2e-2), "mismatch vs. reference"

    print("KERNEL_OK")
</pallas_src>

<mosaic_0001>
module attributes {stable_mosaic.version = 11 : i64} {
  func.func @_self_attention_kernel(%arg0: i32, %arg1: memref<1x8x32xbf16, #tpu.memory_space<vmem>>, %arg2: memref<32x96xbf16, #tpu.memory_space<vmem>>, %arg3: memref<32x32xbf16, #tpu.memory_space<vmem>>, %arg4: memref<1x32xf32, #tpu.memory_space<vmem>>, %arg5: memref<1x8x32xf32, #tpu.memory_space<vmem>>, %arg6: memref<8x96xbf16, #tpu.memory_space<vmem>>, %arg7: memref<8x32xbf16, #tpu.memory_space<vmem>>) attributes {dimension_semantics = [#tpu.dimension_semantics<parallel>], iteration_bounds = array<i64: 2>, scalar_prefetch = 0 : i64, scratch_operands = 2 : i64, tpu.core_type = #tpu.core_type<tc>, window_params = [{transform_indices = @transform_0, window_bounds = array<i64: 1, 8, 32>}, {pipeline_mode = #tpu.pipeline_mode<synchronous>, transform_indices = @transform_1, window_bounds = array<i64: 32, 96>}, {pipeline_mode = #tpu.pipeline_mode<synchronous>, transform_indices = @transform_2, window_bounds = array<i64: 32, 32>}, {pipeline_mode = #tpu.pipeline_mode<synchronous>, transform_indices = @transform_3, window_bounds = array<i64: 1, 32>}, {transform_indices = @transform_4, window_bounds = array<i64: 1, 8, 32>}]} {
    %c0 = arith.constant 0 : index
    %c0_0 = arith.constant 0 : index
    %c0_1 = arith.constant 0 : index
    %0 = vector.load %arg1[%c0, %c0_0, %c0_1] : memref<1x8x32xbf16, #tpu.memory_space<vmem>>, vector<1x8x32xbf16>
    %1 = vector.shape_cast %0 : vector<1x8x32xbf16> to vector<8x32xbf16>
    %c0_2 = arith.constant 0 : index
    %c0_3 = arith.constant 0 : index
    %2 = vector.load %arg2[%c0_2, %c0_3] : memref<32x96xbf16, #tpu.memory_space<vmem>>, vector<32x96xbf16>
    %cst = arith.constant dense<0.000000e+00> : vector<8x96xf32>
    %3 = tpu.matmul %1, %2, %cst {dimension_numbers = #tpu.dot_dimension_numbers<[1], [0], [0], [1], [0, 0, 1, 1], [], []>} : vector<8x32xbf16>, vector<32x96xbf16>, vector<8x96xf32> -> vector<8x96xf32>
    %4 = arith.truncf %3 : vector<8x96xf32> to vector<8x96xbf16>
    %c0_4 = arith.constant 0 : index
    %c0_5 = arith.constant 0 : index
    %5 = vector.load %arg6[%c0_4, %c0_5] : memref<8x96xbf16, #tpu.memory_space<vmem>>, vector<8x96xbf16>
    tpu.vector_store %arg6[%c0_4, %c0_5], %4 {strides = array<i32>} : memref<8x96xbf16, #tpu.memory_space<vmem>>, vector<8x96xbf16>,
    %c0_6 = arith.constant 0 : index
    %c0_7 = arith.constant 0 : index
    %6 = vector.load %arg6[%c0_6, %c0_7] : memref<8x96xbf16, #tpu.memory_space<vmem>>, vector<8x8xbf16>
    %c0_8 = arith.constant 0 : index
    %c32 = arith.constant 32 : index
    %7 = vector.load %arg6[%c0_8, %c32] : memref<8x96xbf16, #tpu.memory_space<vmem>>, vector<8x8xbf16>
    %c0_9 = arith.constant 0 : index
    %c64 = arith.constant 64 : index
    %8 = vector.load %arg6[%c0_9, %c64] : memref<8x96xbf16, #tpu.memory_space<vmem>>, vector<8x8xbf16>
    "tpu.trace_start"() <{level = 10 : i32, message = "qd,kd->qk"}> : () -> ()
    %cst_10 = arith.constant dense<0.000000e+00> : vector<8x8xf32>
    %9 = tpu.matmul %6, %7, %cst_10 {dimension_numbers = #tpu.dot_dimension_numbers<[1], [1], [0], [0], [0, 0, 1, 0], [], []>} : vector<8x8xbf16>, vector<8x8xbf16>, vector<8x8xf32> -> vector<8x8xf32>
    "tpu.trace_stop"() : () -> ()
    %cst_11 = arith.constant dense<0xFF800000> : vector<8xf32>
    %10 = vector.multi_reduction <maximumf>, %9, %cst_11 [1] : vector<8x8xf32> to vector<8xf32>
    %11 = vector.shape_cast %10 : vector<8xf32> to vector<8x1xf32>
    %12 = vector.broadcast %11 : vector<8x1xf32> to vector<8x8xf32>
    %13 = arith.subf %9, %12 : vector<8x8xf32>
    %14 = math.exp %13 : vector<8x8xf32>
    %cst_12 = arith.constant dense<0.000000e+00> : vector<8xf32>
    %15 = vector.multi_reduction <add>, %14, %cst_12 [1] : vector<8x8xf32> to vector<8xf32>
    %16 = vector.shape_cast %15 : vector<8xf32> to vector<8x1xf32>
    %17 = arith.truncf %14 : vector<8x8xf32> to vector<8x8xbf16>
    %cst_13 = arith.constant dense<0.000000e+00> : vector<8x8xf32>
    %18 = tpu.matmul %17, %8, %cst_13 {dimension_numbers = #tpu.dot_dimension_numbers<[1], [0], [0], [1], [0, 0, 1, 1], [], []>} : vector<8x8xbf16>, vector<8x8xbf16>, vector<8x8xf32> -> vector<8x8xf32>
    %19 = tpu.reciprocal %16 {approx = true} : vector<8x1xf32> -> vector<8x1xf32>
    %20 = vector.broadcast %19 : vector<8x1xf32> to vector<8x8xf32>
    %21 = arith.mulf %18, %20 : vector<8x8xf32>
    %22 = arith.truncf %21 : vector<8x8xf32> to vector<8x8xbf16>
    %c0_14 = arith.constant 0 : index
    %c0_15 = arith.constant 0 : index
    %23 = vector.load %arg7[%c0_14, %c0_15] : memref<8x32xbf16, #tpu.memory_space<vmem>>, vector<8x8xbf16>
    tpu.vector_store %arg7[%c0_14, %c0_15], %22 {strides = array<i32>} : memref<8x32xbf16, #tpu.memory_space<vmem>>, vector<8x8xbf16>,
    %c0_16 = arith.constant 0 : index
    %c8 = arith.constant 8 : index
    %24 = vector.load %arg6[%c0_16, %c8] : memref<8x96xbf16, #tpu.memory_space<vmem>>, vector<8x8xbf16>
    %c0_17 = arith.constant 0 : index
    %c40 = arith.constant 40 : index
    %25 = vector.load %arg6[%c0_17, %c40] : memref<8x96xbf16, #tpu.memory_space<vmem>>, vector<8x8xbf16>
    %c0_18 = arith.constant 0 : index
    %c72 = arith.constant 72 : index
    %26 = vector.load %arg6[%c0_18, %c72] : memref<8x96xbf16, #tpu.memory_space<vmem>>, vector<8x8xbf16>
    "tpu.trace_start"() <{level = 10 : i32, message = "qd,kd->qk"}> : () -> ()
    %cst_19 = arith.constant dense<0.000000e+00> : vector<8x8xf32>
    %27 = tpu.matmul %24, %25, %cst_19 {dimension_numbers = #tpu.dot_dimension_numbers<[1], [1], [0], [0], [0, 0, 1, 0], [], []>} : vector<8x8xbf16>, vector<8x8xbf16>, vector<8x8xf32> -> vector<8x8xf32>
    "tpu.trace_stop"() : () -> ()
    %cst_20 = arith.constant dense<0xFF800000> : vector<8xf32>
    %28 = vector.multi_reduction <maximumf>, %27, %cst_20 [1] : vector<8x8xf32> to vector<8xf32>
    %29 = vector.shape_cast %28 : vector<8xf32> to vector<8x1xf32>
    %30 = vector.broadcast %29 : vector<8x1xf32> to vector<8x8xf32>
    %31 = arith.subf %27, %30 : vector<8x8xf32>
    %32 = math.exp %31 : vector<8x8xf32>
    %cst_21 = arith.constant dense<0.000000e+00> : vector<8xf32>
    %33 = vector.multi_reduction <add>, %32, %cst_21 [1] : vector<8x8xf32> to vector<8xf32>
    %34 = vector.shape_cast %33 : vector<8xf32> to vector<8x1xf32>
    %35 = arith.truncf %32 : vector<8x8xf32> to vector<8x8xbf16>
    %cst_22 = arith.constant dense<0.000000e+00> : vector<8x8xf32>
    %36 = tpu.matmul %35, %26, %cst_22 {dimension_numbers = #tpu.dot_dimension_numbers<[1], [0], [0], [1], [0, 0, 1, 1], [], []>} : vector<8x8xbf16>, vector<8x8xbf16>, vector<8x8xf32> -> vector<8x8xf32>
    %37 = tpu.reciprocal %34 {approx = true} : vector<8x1xf32> -> vector<8x1xf32>
    %38 = vector.broadcast %37 : vector<8x1xf32> to vector<8x8xf32>
    %39 = arith.mulf %36, %38 : vector<8x8xf32>
    %40 = arith.truncf %39 : vector<8x8xf32> to vector<8x8xbf16>
    %c0_23 = arith.constant 0 : index
    %c8_24 = arith.constant 8 : index
    %41 = vector.load %arg7[%c0_23, %c8_24] : memref<8x32xbf16, #tpu.memory_space<vmem>>, vector<8x8xbf16>
    tpu.vector_store %arg7[%c0_23, %c8_24], %40 {strides = array<i32>} : memref<8x32xbf16, #tpu.memory_space<vmem>>, vector<8x8xbf16>,
    %c0_25 = arith.constant 0 : index
    %c16 = arith.constant 16 : index
    %42 = vector.load %arg6[%c0_25, %c16] : memref<8x96xbf16, #tpu.memory_space<vmem>>, vector<8x8xbf16>
    %c0_26 = arith.constant 0 : index
    %c48 = arith.constant 48 : index
    %43 = vector.load %arg6[%c0_26, %c48] : memref<8x96xbf16, #tpu.memory_space<vmem>>, vector<8x8xbf16>
    %c0_27 = arith.constant 0 : index
    %c80 = arith.constant 80 : index
    %44 = vector.load %arg6[%c0_27, %c80] : memref<8x96xbf16, #tpu.memory_space<vmem>>, vector<8x8xbf16>
    "tpu.trace_start"() <{level = 10 : i32, message = "qd,kd->qk"}> : () -> ()
    %cst_28 = arith.constant dense<0.000000e+00> : vector<8x8xf32>
    %45 = tpu.matmul %42, %43, %cst_28 {dimension_numbers = #tpu.dot_dimension_numbers<[1], [1], [0], [0], [0, 0, 1, 0], [], []>} : vector<8x8xbf16>, vector<8x8xbf16>, vector<8x8xf32> -> vector<8x8xf32>
    "tpu.trace_stop"() : () -> ()
    %cst_29 = arith.constant dense<0xFF800000> : vector<8xf32>
    %46 = vector.multi_reduction <maximumf>, %45, %cst_29 [1] : vector<8x8xf32> to vector<8xf32>
    %47 = vector.shape_cast %46 : vector<8xf32> to vector<8x1xf32>
    %48 = vector.broadcast %47 : vector<8x1xf32> to vector<8x8xf32>
    %49 = arith.subf %45, %48 : vector<8x8xf32>
    %50 = math.exp %49 : vector<8x8xf32>
    %cst_30 = arith.constant dense<0.000000e+00> : vector<8xf32>
    %51 = vector.multi_reduction <add>, %50, %cst_30 [1] : vector<8x8xf32> to vector<8xf32>
    %52 = vector.shape_cast %51 : vector<8xf32> to vector<8x1xf32>
    %53 = arith.truncf %50 : vector<8x8xf32> to vector<8x8xbf16>
    %cst_31 = arith.constant dense<0.000000e+00> : vector<8x8xf32>
    %54 = tpu.matmul %53, %44, %cst_31 {dimension_numbers = #tpu.dot_dimension_numbers<[1], [0], [0], [1], [0, 0, 1, 1], [], []>} : vector<8x8xbf16>, vector<8x8xbf16>, vector<8x8xf32> -> vector<8x8xf32>
    %55 = tpu.reciprocal %52 {approx = true} : vector<8x1xf32> -> vector<8x1xf32>
    %56 = vector.broadcast %55 : vector<8x1xf32> to vector<8x8xf32>
    %57 = arith.mulf %54, %56 : vector<8x8xf32>
    %58 = arith.truncf %57 : vector<8x8xf32> to vector<8x8xbf16>
    %c0_32 = arith.constant 0 : index
    %c16_33 = arith.constant 16 : index
    %59 = vector.load %arg7[%c0_32, %c16_33] : memref<8x32xbf16, #tpu.memory_space<vmem>>, vector<8x8xbf16>
    tpu.vector_store %arg7[%c0_32, %c16_33], %58 {strides = array<i32>} : memref<8x32xbf16, #tpu.memory_space<vmem>>, vector<8x8xbf16>,
    %c0_34 = arith.constant 0 : index
    %c24 = arith.constant 24 : index
    %60 = vector.load %arg6[%c0_34, %c24] : memref<8x96xbf16, #tpu.memory_space<vmem>>, vector<8x8xbf16>
    %c0_35 = arith.constant 0 : index
    %c56 = arith.constant 56 : index
    %61 = vector.load %arg6[%c0_35, %c56] : memref<8x96xbf16, #tpu.memory_space<vmem>>, vector<8x8xbf16>
    %c0_36 = arith.constant 0 : index
    %c88 = arith.constant 88 : index
    %62 = vector.load %arg6[%c0_36, %c88] : memref<8x96xbf16, #tpu.memory_space<vmem>>, vector<8x8xbf16>
    "tpu.trace_start"() <{level = 10 : i32, message = "qd,kd->qk"}> : () -> ()
    %cst_37 = arith.constant dense<0.000000e+00> : vector<8x8xf32>
    %63 = tpu.matmul %60, %61, %cst_37 {dimension_numbers = #tpu.dot_dimension_numbers<[1], [1], [0], [0], [0, 0, 1, 0], [], []>} : vector<8x8xbf16>, vector<8x8xbf16>, vector<8x8xf32> -> vector<8x8xf32>
    "tpu.trace_stop"() : () -> ()
    %cst_38 = arith.constant dense<0xFF800000> : vector<8xf32>
    %64 = vector.multi_reduction <maximumf>, %63, %cst_38 [1] : vector<8x8xf32> to vector<8xf32>
    %65 = vector.shape_cast %64 : vector<8xf32> to vector<8x1xf32>
    %66 = vector.broadcast %65 : vector<8x1xf32> to vector<8x8xf32>
    %67 = arith.subf %63, %66 : vector<8x8xf32>
    %68 = math.exp %67 : vector<8x8xf32>
    %cst_39 = arith.constant dense<0.000000e+00> : vector<8xf32>
    %69 = vector.multi_reduction <add>, %68, %cst_39 [1] : vector<8x8xf32> to vector<8xf32>
    %70 = vector.shape_cast %69 : vector<8xf32> to vector<8x1xf32>
    %71 = arith.truncf %68 : vector<8x8xf32> to vector<8x8xbf16>
    %cst_40 = arith.constant dense<0.000000e+00> : vector<8x8xf32>
    %72 = tpu.matmul %71, %62, %cst_40 {dimension_numbers = #tpu.dot_dimension_numbers<[1], [0], [0], [1], [0, 0, 1, 1], [], []>} : vector<8x8xbf16>, vector<8x8xbf16>, vector<8x8xf32> -> vector<8x8xf32>
    %73 = tpu.reciprocal %70 {approx = true} : vector<8x1xf32> -> vector<8x1xf32>
    %74 = vector.broadcast %73 : vector<8x1xf32> to vector<8x8xf32>
    %75 = arith.mulf %72, %74 : vector<8x8xf32>
    %76 = arith.truncf %75 : vector<8x8xf32> to vector<8x8xbf16>
    %c0_41 = arith.constant 0 : index
    %c24_42 = arith.constant 24 : index
    %77 = vector.load %arg7[%c0_41, %c24_42] : memref<8x32xbf16, #tpu.memory_space<vmem>>, vector<8x8xbf16>
    tpu.vector_store %arg7[%c0_41, %c24_42], %76 {strides = array<i32>} : memref<8x32xbf16, #tpu.memory_space<vmem>>, vector<8x8xbf16>,
    %c0_43 = arith.constant 0 : index
    %c0_44 = arith.constant 0 : index
    %78 = vector.load %arg7[%c0_43, %c0_44] : memref<8x32xbf16, #tpu.memory_space<vmem>>, vector<8x32xbf16>
    %c0_45 = arith.constant 0 : index
    %c0_46 = arith.constant 0 : index
    %79 = vector.load %arg3[%c0_45, %c0_46] : memref<32x32xbf16, #tpu.memory_space<vmem>>, vector<32x32xbf16>
    %cst_47 = arith.constant dense<0.000000e+00> : vector<8x32xf32>
    %80 = tpu.matmul %78, %79, %cst_47 {dimension_numbers = #tpu.dot_dimension_numbers<[1], [0], [0], [1], [0, 0, 1, 1], [], []>} : vector<8x32xbf16>, vector<32x32xbf16>, vector<8x32xf32> -> vector<8x32xf32>
    %c0_48 = arith.constant 0 : index
    %c0_49 = arith.constant 0 : index
    %81 = vector.load %arg4[%c0_48, %c0_49] : memref<1x32xf32, #tpu.memory_space<vmem>>, vector<1x32xf32>
    %82 = vector.broadcast %81 : vector<1x32xf32> to vector<8x32xf32>
    %83 = arith.addf %80, %82 : vector<8x32xf32>
    %c0_50 = arith.constant 0 : index
    %c0_51 = arith.constant 0 : index
    %c0_52 = arith.constant 0 : index
    %84 = vector.load %arg5[%c0_50, %c0_51, %c0_52] : memref<1x8x32xf32, #tpu.memory_space<vmem>>, vector<1x8x32xf32>
    %85 = vector.shape_cast %84 : vector<1x8x32xf32> to vector<8x32xf32>
    %86 = vector.shape_cast %83 : vector<8x32xf32> to vector<1x8x32xf32>
    tpu.vector_store %arg5[%c0_50, %c0_51, %c0_52], %86 {strides = array<i32>} : memref<1x8x32xf32, #tpu.memory_space<vmem>>, vector<1x8x32xf32>,
    return
  }
  func.func @transform_0(%arg0: i32) -> (i32, i32, i32) {
    %c0_i32 = arith.constant 0 : i32
    %c0_i32_0 = arith.constant 0 : i32
    %c0_i32_1 = arith.constant 0 : i32
    return %arg0, %c0_i32, %c0_i32_0 : i32, i32, i32
  }
  func.func @transform_1(%arg0: i32) -> (i32, i32) {
    %c0_i32 = arith.constant 0 : i32
    %c0_i32_0 = arith.constant 0 : i32
    %c0_i32_1 = arith.constant 0 : i32
    return %c0_i32, %c0_i32_0 : i32, i32
  }
  func.func @transform_2(%arg0: i32) -> (i32, i32) {
    %c0_i32 = arith.constant 0 : i32
    %c0_i32_0 = arith.constant 0 : i32
    %c0_i32_1 = arith.constant 0 : i32
    return %c0_i32, %c0_i32_0 : i32, i32
  }
  func.func @transform_3(%arg0: i32) -> (i32, i32) {
    %c0_i32 = arith.constant 0 : i32
    %c0_i32_0 = arith.constant 0 : i32
    %c0_i32_1 = arith.constant 0 : i32
    return %c0_i32, %c0_i32_0 : i32, i32
  }
  func.func @transform_4(%arg0: i32) -> (i32, i32, i32) {
    %c0_i32 = arith.constant 0 : i32
    %c0_i32_0 = arith.constant 0 : i32
    %c0_i32_1 = arith.constant 0 : i32
    return %arg0, %c0_i32, %c0_i32_0 : i32, i32, i32
  }
}

</mosaic_0001>

<llo_original>
// kernel: tpu_custom_call.1
$region0: #{tpu_custom_call.1}
  #allocation0 [shape = 'u32[]', space=smem, size = 0x4, offset = 0x4, fixed_abs, tag = 'smem constant byte address 0x4 - core index']
  #allocation1 [shape = 'u32[72,128]{1,0:T(1,128)}', space=vmem, size = 0x9000, scoped, tag = 'internal scratch']
  #allocation2 [shape = 'bf16[8,96]{1,0:T(8,128)(2,1)}', space=vmem, size = 0x800, scoped, tag = 'scratch operand']
  #allocation3 [shape = 'bf16[8,32]{1,0:T(8,128)(2,1)}', space=vmem, size = 0x800, scoped, tag = 'scratch operand']
  %s0 = inlined_call_operand.hbm [shape: bf16[2,8,32], index: 0, kind: input, shape index: {}]
  %s1 = inlined_call_operand.hbm [shape: bf16[32,96], index: 1, kind: input, shape index: {}]
  %s2 = inlined_call_operand.hbm [shape: bf16[32,32], index: 2, kind: input, shape index: {}]
  %s3 = inlined_call_operand.vmem [shape: f32[1,32], index: 3, kind: input, shape index: {}]
  %s4 = inlined_call_operand.hbm [shape: f32[2,8,32], index: 4, kind: output, shape index: {}]
  %s5 = sld [smem:[#allocation0]]
  $region61: #{tpu_custom_call.1} parent=0
    _
  %s7 = ssub.s32 1, %s5
  %s8 = scalar_select 0, %s7, %s5
  $region1: #{tpu_custom_call.1} parent=0
    #allocation4 [shape = 'u8[4096]{0}', space=vmem, size = 0x1000, scoped, tag = 'input window, operand 0']
    #allocation5 [shape = 's32[2]{0}', space=sflag, size = 0x8, scoped, tag = 'scoped memory for tpu_custom_call.1']
    #allocation6 [shape = 's32[2]{0}', space=sflag, size = 0x8, scoped, tag = 'scoped memory for tpu_custom_call.1']
    #allocation7 [shape = 'u8[8192]{0}', space=vmem, size = 0x2000, scoped, tag = 'input window, operand 1, single buffered']
    #allocation8 [shape = 's32[1]{0}', space=sflag, size = 0x4, scoped, tag = 'scoped memory for tpu_custom_call.1']
    #allocation9 [shape = 'u8[8192]{0}', space=vmem, size = 0x2000, scoped, tag = 'input window, operand 2, single buffered']
    #allocation10 [shape = 'u8[8192]{0}', space=vmem, size = 0x2000, scoped, tag = 'output window, operand 0']
    %9 = vsyncpa [#allocation5], 0
    %s10 = scalar_lea.sflag [#allocation5], 1
    %11 = vsyncpa %s10, 0
    %12 = vsyncpa [#allocation8], 0
    %13 = vsyncpa [#allocation6], 0
    %s14 = scalar_lea.sflag [#allocation6], 1
    %15 = vsyncpa %s14, 0
    loop: start=0, step=1, limit=4
    $region2: #{tpu_custom_call.1} parent=1 // loop_pre_header
      _
    $region3: #{tpu_custom_call.1} parent=1 // loop_header
      %s17 = sphi 0, %s21
      %p18 = scmp.ge.s32.totalorder %s17, 4
      %s27 = sphi 0, %s29
      %s30 = sphi 0, %s27
      %s31 = sphi 0, %s30
      %s47 = sphi 0, %s31
      %s51 = sphi 0, %s51
      %s53 = sphi 0, %s51
      %s54 = sphi 0, %s53
      %s68 = sphi 0, %s54
      %s72 = sphi 0, %s72
      %s74 = sphi 0, %s72
      %s75 = sphi 0, %s74
      %s89 = sphi 0, %s75
      %s93 = sphi 0, %s93
      %s95 = sphi 0, %s93
      %s96 = sphi 0, %s95
      %s110 = sphi 0, %s96
      %s116 = sphi 0, %s118
      %s119 = sphi 0, %s116
      %s120 = sphi 0, %s119
      %s136 = sphi 0, %s120
    $region4: #{tpu_custom_call.1} parent=1 // loop_header_branch
      %20 = sbr.rel (%p18) target = $region8
    $region5: #{tpu_custom_call.1} parent=1 // loop_body
      %s22 = ssub.s32 %s17, 1
      %s23 = ssub.s32 %s17, 2
      %s24 = sadd.s32 %s17, 1
      %s25 = ssub.s32 %s17, %s24
      %p26 = scmp.eq.s32.totalorder %s25, 0
      %s28 = sadd.s32 %s27, 1
      %s29 = scalar_select %p26, %s27, %s28
      %p32 = pneg %p26
      %p33 = scmp.eq.s32.totalorder %s17, 1
      %p34 = por %p32, %p33
      %p35 = scmp.ne.s32.totalorder %s27, %s30
      %p36 = scmp.eq.s32.totalorder %s17, 0
      %p37 = por %p35, %p36
      %p38 = scmp.ne.s32.totalorder %s27, %s30
      %p39 = scmp.eq.s32.totalorder %s22, 1
      %p40 = por %p38, %p39
      %p41 = scmp.ne.s32.totalorder %s30, %s31
      %p42 = scmp.eq.s32.totalorder %s22, 0
      %p43 = por %p41, %p42
      %p44 = scmp.ne.s32.totalorder %s30, %s31
      %p45 = scmp.eq.s32.totalorder %s23, 1
      %p46 = por %p44, %p45
      %p48 = scmp.ne.s32.totalorder %s31, %s47
      %p49 = scmp.eq.s32.totalorder %s23, 0
      %p50 = por %p48, %p49
      %s52 = sadd.s32 %s51, 1
      %p55 = scmp.eq.s32.totalorder %s17, 1
      %p56 = scmp.ne.s32.totalorder %s51, %s53
      %p57 = scmp.eq.s32.totalorder %s17, 0
      %p58 = por %p56, %p57
      %p59 = scmp.ne.s32.totalorder %s51, %s53
      %p60 = scmp.eq.s32.totalorder %s22, 1
      %p61 = por %p59, %p60
      %p62 = scmp.ne.s32.totalorder %s53, %s54
      %p63 = scmp.eq.s32.totalorder %s22, 0
      %p64 = por %p62, %p63
      %p65 = scmp.ne.s32.totalorder %s53, %s54
      %p66 = scmp.eq.s32.totalorder %s23, 1
      %p67 = por %p65, %p66
      %p69 = scmp.ne.s32.totalorder %s54, %s68
      %p70 = scmp.eq.s32.totalorder %s23, 0
      %p71 = por %p69, %p70
      %s73 = sadd.s32 %s72, 1
      %p76 = scmp.eq.s32.totalorder %s17, 1
      %p77 = scmp.ne.s32.totalorder %s72, %s74
      %p78 = scmp.eq.s32.totalorder %s17, 0
      %p79 = por %p77, %p78
      %p80 = scmp.ne.s32.totalorder %s72, %s74
      %p81 = scmp.eq.s32.totalorder %s22, 1
      %p82 = por %p80, %p81
      %p83 = scmp.ne.s32.totalorder %s74, %s75
      %p84 = scmp.eq.s32.totalorder %s22, 0
      %p85 = por %p83, %p84
      %p86 = scmp.ne.s32.totalorder %s74, %s75
      %p87 = scmp.eq.s32.totalorder %s23, 1
      %p88 = por %p86, %p87
      %p90 = scmp.ne.s32.totalorder %s75, %s89
      %p91 = scmp.eq.s32.totalorder %s23, 0
      %p92 = por %p90, %p91
      %s94 = sadd.s32 %s93, 1
      %p97 = scmp.eq.s32.totalorder %s17, 1
      %p98 = scmp.ne.s32.totalorder %s93, %s95
      %p99 = scmp.eq.s32.totalorder %s17, 0
      %p100 = por %p98, %p99
      %p101 = scmp.ne.s32.totalorder %s93, %s95
      %p102 = scmp.eq.s32.totalorder %s22, 1
      %p103 = por %p101, %p102
      %p104 = scmp.ne.s32.totalorder %s95, %s96
      %p105 = scmp.eq.s32.totalorder %s22, 0
      %p106 = por %p104, %p105
      %p107 = scmp.ne.s32.totalorder %s95, %s96
      %p108 = scmp.eq.s32.totalorder %s23, 1
      %p109 = por %p107, %p108
      %p111 = scmp.ne.s32.totalorder %s96, %s110
      %p112 = scmp.eq.s32.totalorder %s23, 0
      %p113 = por %p111, %p112
      %s114 = ssub.s32 %s17, %s24
      %p115 = scmp.eq.s32.totalorder %s114, 0
      %s117 = sadd.s32 %s116, 1
      %s118 = scalar_select %p115, %s116, %s117
      %p121 = pneg %p115
      %p122 = scmp.eq.s32.totalorder %s17, 1
      %p123 = por %p121, %p122
      %p124 = scmp.ne.s32.totalorder %s116, %s119
      %p125 = scmp.eq.s32.totalorder %s17, 0
      %p126 = por %p124, %p125
      %p127 = scmp.ne.s32.totalorder %s116, %s119
      %p128 = scmp.eq.s32.totalorder %s22, 1
      %p129 = por %p127, %p128
      %p130 = scmp.ne.s32.totalorder %s119, %s120
      %p131 = scmp.eq.s32.totalorder %s22, 0
      %p132 = por %p130, %p131
      %p133 = scmp.ne.s32.totalorder %s119, %s120
      %p134 = scmp.eq.s32.totalorder %s23, 1
      %p135 = por %p133, %p134
      %p137 = scmp.ne.s32.totalorder %s120, %s136
      %p138 = scmp.eq.s32.totalorder %s23, 0
      %p139 = por %p137, %p138
      %p140 = scmp.le.s32.totalorder 1, %s17
      %p141 = scmp.lt.s32.totalorder %s17, 3
      %p142 = pnand %p140, %p141
      %p143 = pneg %p142
      // Predicated region
      $region9: #{tpu_custom_call.1} parent=5 // pred_check
        _
      $region10: #{tpu_custom_call.1} parent=5 // pred_check_branch
        %145 = sbr.rel (%p142) target = $region12
      $region11: #{tpu_custom_call.1} parent=5 // pred_region
        %s146 = ssub.s32 %s17, 1
        // Predicated region
        $region13: #{tpu_custom_call.1} parent=11 // pred_check
          %p147 = pneg %p64
        $region14: #{tpu_custom_call.1} parent=11 // pred_check_branch
          %149 = sbr.rel (%p147) target = $region16
        $region15: #{tpu_custom_call.1} parent=11 // pred_region
          %151 = vsyncadd [#allocation8], 0
          %s152 = sshll.u32 %s1, 4
          %s153 = int_to_ptr.hbm [resolvable:$true] %s152
          %s154 = sshll.u32 [#allocation7], 4
          %s155 = int_to_ptr.vmem [resolvable:$true] %s154
          %160 = dma.hbm_to_vmem [thread:$0]  %s153, 256, %s155, [#allocation8], 64, 64, 4
        $region16: #{tpu_custom_call.1} parent=11 // pred_fallthru
          _
        // Predicated region
        $region17: #{tpu_custom_call.1} parent=11 // pred_check
          %p161 = pneg %p85
        $region18: #{tpu_custom_call.1} parent=11 // pred_check_branch
          %163 = sbr.rel (%p161) target = $region20
        $region19: #{tpu_custom_call.1} parent=11 // pred_region
          %165 = vsyncadd [#allocation8], 0
          %s166 = sshll.u32 %s2, 4
          %s167 = int_to_ptr.hbm [resolvable:$true] %s166
          %s168 = sshll.u32 [#allocation9], 4
          %s169 = int_to_ptr.vmem [resolvable:$true] %s168
          %174 = dma.hbm_to_vmem [thread:$0]  %s167, 256, %s169, [#allocation8], 64, 64, 4
        $region20: #{tpu_custom_call.1} parent=11 // pred_fallthru
          _
        // Predicated region
        $region21: #{tpu_custom_call.1} parent=11 // pred_check
          %p175 = pneg %p106
        $region22: #{tpu_custom_call.1} parent=11 // pred_check_branch
          %177 = sbr.rel (%p175) target = $region24
        $region23: #{tpu_custom_call.1} parent=11 // pred_region
          _
        $region24: #{tpu_custom_call.1} parent=11 // pred_fallthru
          _
      $region12: #{tpu_custom_call.1} parent=5 // pred_fallthru
        _
      %p178 = scmp.lt.s32.totalorder %s17, 2
      // Predicated region
      $region25: #{tpu_custom_call.1} parent=5 // pred_check
        %p179 = pneg %p178
      $region26: #{tpu_custom_call.1} parent=5 // pred_check_branch
        %181 = sbr.rel (%p179) target = $region28
      $region27: #{tpu_custom_call.1} parent=5 // pred_region
        // Predicated region
        $region29: #{tpu_custom_call.1} parent=27 // pred_check
          %p182 = pneg %p37
        $region30: #{tpu_custom_call.1} parent=27 // pred_check_branch
          %184 = sbr.rel (%p182) target = $region32
        $region31: #{tpu_custom_call.1} parent=27 // pred_region
          %s185 = sand.u32 %s27, 1
          %s186 = scalar_lea.sflag [#allocation5], %s185
          %s187 = sand.u32 %s27, 1
          %s188 = smul.addr %s187, 4
          %s189 = scalar_lea.vmem [#allocation4], %s188
          %191 = vsyncadd %s186, 0
          %s192 = smul.addr %s17, 4
          %s193 = scalar_lea.hbm %s0, %s192
          %s195 = sshll.u32 %s193, 4
          %s196 = int_to_ptr.hbm [resolvable:$true] %s195
          %s197 = sshll.u32 %s189, 4
          %s198 = int_to_ptr.vmem [resolvable:$true] %s197
          %200 = dma.hbm_to_vmem [thread:$0]  %s196, 64, %s198, %s186
        $region32: #{tpu_custom_call.1} parent=27 // pred_fallthru
          _
      $region28: #{tpu_custom_call.1} parent=5 // pred_fallthru
        _
      %p201 = scmp.le.s32.totalorder 1, %s17
      %p202 = scmp.lt.s32.totalorder %s17, 3
      %p203 = pnand %p201, %p202
      %p204 = pneg %p203
      // Predicated region
      $region33: #{tpu_custom_call.1} parent=5 // pred_check
        _
      $region34: #{tpu_custom_call.1} parent=5 // pred_check_branch
        %206 = sbr.rel (%p203) target = $region36
      $region35: #{tpu_custom_call.1} parent=5 // pred_region
        %s207 = ssub.s32 %s17, 1
        %s208 = sand.u32 %s30, 1
        %s209 = scalar_lea.sflag [#allocation5], %s208
        %s210 = sand.u32 %s30, 1
        %s211 = smul.addr %s210, 4
        %s212 = scalar_lea.vmem [#allocation4], %s211
        // Predicated region
        $region37: #{tpu_custom_call.1} parent=35 // pred_check
          %p213 = pneg %p43
        $region38: #{tpu_custom_call.1} parent=35 // pred_check_branch
          %215 = sbr.rel (%p213) target = $region40
        $region39: #{tpu_custom_call.1} parent=35 // pred_region
          %217 = dma.done %s209, 64
        $region40: #{tpu_custom_call.1} parent=35 // pred_fallthru
          _
        // Predicated region
        $region41: #{tpu_custom_call.1} parent=35 // pred_check
          %p218 = pneg %p64
        $region42: #{tpu_custom_call.1} parent=35 // pred_check_branch
          %220 = sbr.rel (%p218) target = $region44
        $region43: #{tpu_custom_call.1} parent=35 // pred_region
          %222 = dma.done [#allocation8], 256
        $region44: #{tpu_custom_call.1} parent=35 // pred_fallthru
          _
        // Predicated region
        $region45: #{tpu_custom_call.1} parent=35 // pred_check
          %p223 = pneg %p85
        $region46: #{tpu_custom_call.1} parent=35 // pred_check_branch
          %225 = sbr.rel (%p223) target = $region48
        $region47: #{tpu_custom_call.1} parent=35 // pred_region
          %227 = dma.done [#allocation8], 256
        $region48: #{tpu_custom_call.1} parent=35 // pred_fallthru
          _
        %s228 = sand.u32 %s30, 1
        %s229 = scalar_lea.sflag [#allocation5], %s228
        %s230 = sand.u32 %s30, 1
        %s231 = smul.addr %s230, 4
        %s232 = scalar_lea.vmem [#allocation4], %s231
        %p233 = pneg %p43
        %p234 = pneg %p40
        %p235 = pneg %p64
        %p236 = pneg %p61
        %p237 = pneg %p85
        %p238 = pneg %p82
        %p239 = pneg %p106
        %p240 = pneg %p103
        %p241 = pneg %p132
        %p242 = pneg %p129
        %s243 = sand.u32 %s119, 1
        %s244 = scalar_lea.sflag [#allocation6], %s243
        %s245 = sand.u32 %s119, 1
        %s246 = smul.addr %s245, 8
        %s247 = scalar_lea.vmem [#allocation10], %s246
        %v249 = vld [vmem:[%s212] sm:$0xf]
        %v250 = vld [vmem:[#allocation7] sm:$0xf]
        %v251 = vld [vmem:[#allocation7 + $0x4] sm:$0xf]
        %v252 = vld [vmem:[#allocation7 + $0x8] sm:$0xf]
        %v253 = vld [vmem:[#allocation7 + $0xc] sm:$0xf]
        %v258 = vunpack.c.l.b16 %v250
        %v259 = vunpack.c.l.b16 %v251
        %v260 = vunpack.c.l.b16 %v252
        %v261 = vunpack.c.l.b16 %v253
        %v262 = vpack.c.b16 %v259, %v258
        %v263 = vpack.c.b16 %v261, %v260
        %vm266 = vcmask 261120
        %v268 = vsel %vm266, %v249, 0
        %270 = vmatpush.bf16.msra.mxu0 0
        %271 = vmatpush.bf16.msra.mxu0 0
        %272 = vmatpush.bf16.msra.mxu0 0
        %273 = vmatpush.bf16.msra.mxu0 0
        %274 = vmatpush.bf16.msra.mxu0 0
        %275 = vmatpush.bf16.msra.mxu0 0
        %276 = vmatpush.bf16.msra.mxu0 %v263
        %277 = vmatpush.bf16.msra.mxu0 %v262
        %278 = vmatmul.bf16.gmra.mxu0 %v268
        %v279 = vpop.f32.mrf.mxu0
        %v280 = vadd.f32 0.0, %v279
        %v281 = vpop.f32.mrf.mxu0
        %282 = vdwg.mxu0
        %v283 = vpack.c.bf16 %v280, %v280
        %vm284 = vcmask 781312
        %285 = vst.msk [vmem:[#allocation2] sm:$0xf] %vm284, %v283
        %v286 = vld [vmem:[#allocation2] sm:$0xf]
        %v288 = vunpack.c.l.b16 %v286
        %v289 = vpack.c.b16 %v288, %v288
        %290 = vrot.lane.b32.xlu0 %v289, 96
        %v291 = vpop.permute.xlu0 %290
        %vm292 = vcmask 64512
        %v294 = vsel %vm292, %v286, 0
        %v297 = vsel %vm292, %v291, 0
        %299 = vmatpush.bf16.xpose.msra.mxu0 0
        %300 = vmatpush.bf16.xpose.msra.mxu0 0
        %301 = vmatpush.bf16.xpose.msra.mxu0 0
        %302 = vmatpush.bf16.xpose.msra.mxu0 0
        %303 = vmatpush.bf16.xpose.msra.mxu0 0
        %304 = vmatpush.bf16.xpose.msra.mxu0 0
        %305 = vmatpush.bf16.xpose.msra.mxu0 0
        %306 = vmatpush.bf16.xpose.msra.mxu0 %v297
        %307 = vmatmul.bf16.gmra.mxu0 %v294
        %v308 = vpop.f32.mrf.mxu0
        %v309 = vadd.f32 0.0, %v308
        %v310 = vpop.f32.mrf.mxu0
        %311 = vdwg.mxu0
        %v312 = vsel %vm292, %v309, -inf
        %313 = vmax.xlane.f32.xlu0 %v312
        %v314 = vpop.xlane.xlu0 %313
        %v315 = vsub.f32 %v309, %v314
        %v316 = vmul.f32 %v315, 1.442695
        %v317 = vpow.pop %v316
        %v318 = vsel %vm292, %v317, 0.0
        %319 = vadd.xlane.f32.xlu0 %v318
        %v320 = vpop.xlane.xlu0 %319
        %v321 = vpack.c.bf16 %v317, %v317
        %322 = vrot.lane.b32.xlu0 %v289, 64
        %v323 = vpop.permute.xlu0 %322
        %v325 = vsel %vm292, %v321, 0
        %vm327 = vcmask 1043456
        %v329 = vsel %vm327, %v323, 0
        %331 = vmatpush.bf16.msra.mxu0 0
        %332 = vmatpush.bf16.msra.mxu0 0
        %333 = vmatpush.bf16.msra.mxu0 0
        %334 = vmatpush.bf16.msra.mxu0 0
        %335 = vmatpush.bf16.msra.mxu0 0
        %336 = vmatpush.bf16.msra.mxu0 0
        %337 = vmatpush.bf16.msra.mxu0 0
        %338 = vmatpush.bf16.msra.mxu0 %v329
        %339 = vmatmul.bf16.gmra.mxu0 %v325
        %v340 = vpop.f32.mrf.mxu0
        %v341 = vadd.f32 0.0, %v340
        %v342 = vpop.f32.mrf.mxu0
        %343 = vdwg.mxu0
        %v344 = vrcp.pop %v320
        %v345 = vmul.f32 %v341, %v344
        %v346 = vpack.c.bf16 %v345, %v345
        %vm347 = vcmask 60416
        %348 = vst.msk [vmem:[#allocation3] sm:$0xf] %vm347, %v346
        %v349 = vld [vmem:[#allocation2] sm:$0xf]
        %v351 = vunpack.c.l.b16 %v349
        %v352 = vpack.c.b16 %v351, %v351
        %353 = vrot.lane.b32.xlu0 %v352, 120
        %v354 = vpop.permute.xlu0 %353
        %355 = vrot.lane.b32.xlu0 %v352, 88
        %v356 = vpop.permute.xlu0 %355
        %v358 = vsel %vm292, %v354, 0
        %v361 = vsel %vm292, %v356, 0
        %363 = vmatpush.bf16.xpose.msra.mxu0 0
        %364 = vmatpush.bf16.xpose.msra.mxu0 0
        %365 = vmatpush.bf16.xpose.msra.mxu0 0
        %366 = vmatpush.bf16.xpose.msra.mxu0 0
        %367 = vmatpush.bf16.xpose.msra.mxu0 0
        %368 = vmatpush.bf16.xpose.msra.mxu0 0
        %369 = vmatpush.bf16.xpose.msra.mxu0 0
        %370 = vmatpush.bf16.xpose.msra.mxu0 %v361
        %371 = vmatmul.bf16.gmra.mxu0 %v358
        %v372 = vpop.f32.mrf.mxu0
        %v373 = vadd.f32 0.0, %v372
        %v374 = vpop.f32.mrf.mxu0
        %375 = vdwg.mxu0
        %v376 = vsel %vm292, %v373, -inf
        %377 = vmax.xlane.f32.xlu0 %v376
        %v378 = vpop.xlane.xlu0 %377
        %v379 = vsub.f32 %v373, %v378
        %v380 = vmul.f32 %v379, 1.442695
        %v381 = vpow.pop %v380
        %v382 = vsel %vm292, %v381, 0.0
        %383 = vadd.xlane.f32.xlu0 %v382
        %v384 = vpop.xlane.xlu0 %383
        %v385 = vpack.c.bf16 %v381, %v381
        %386 = vrot.lane.b32.xlu0 %v352, 56
        %v387 = vpop.permute.xlu0 %386
        %v389 = vsel %vm292, %v385, 0
        %v392 = vsel %vm327, %v387, 0
        %394 = vmatpush.bf16.msra.mxu0 0
        %395 = vmatpush.bf16.msra.mxu0 0
        %396 = vmatpush.bf16.msra.mxu0 0
        %397 = vmatpush.bf16.msra.mxu0 0
        %398 = vmatpush.bf16.msra.mxu0 0
        %399 = vmatpush.bf16.msra.mxu0 0
        %400 = vmatpush.bf16.msra.mxu0 0
        %401 = vmatpush.bf16.msra.mxu0 %v392
        %402 = vmatmul.bf16.gmra.mxu0 %v389
        %v403 = vpop.f32.mrf.mxu0
        %v404 = vadd.f32 0.0, %v403
        %v405 = vpop.f32.mrf.mxu0
        %406 = vdwg.mxu0
        %v407 = vrcp.pop %v384
        %v408 = vmul.f32 %v404, %v407
        %v409 = vpack.c.bf16 %v408, %v408
        %411 = vrot.lane.b32.xlu0 %v409, 8
        %v412 = vpop.permute.xlu0 %411
        %vm414 = vcmask 126016
        %415 = vst.msk [vmem:[#allocation3] sm:$0xf] %vm414, %v412
        %v416 = vld [vmem:[#allocation2] sm:$0xf]
        %v418 = vunpack.c.l.b16 %v416
        %v419 = vpack.c.b16 %v418, %v418
        %420 = vrot.lane.b32.xlu0 %v419, 112
        %v421 = vpop.permute.xlu0 %420
        %422 = vrot.lane.b32.xlu0 %v419, 80
        %v423 = vpop.permute.xlu0 %422
        %v425 = vsel %vm292, %v421, 0
        %v428 = vsel %vm292, %v423, 0
        %430 = vmatpush.bf16.xpose.msra.mxu0 0
        %431 = vmatpush.bf16.xpose.msra.mxu0 0
        %432 = vmatpush.bf16.xpose.msra.mxu0 0
        %433 = vmatpush.bf16.xpose.msra.mxu0 0
        %434 = vmatpush.bf16.xpose.msra.mxu0 0
        %435 = vmatpush.bf16.xpose.msra.mxu0 0
        %436 = vmatpush.bf16.xpose.msra.mxu0 0
        %437 = vmatpush.bf16.xpose.msra.mxu0 %v428
        %438 = vmatmul.bf16.gmra.mxu0 %v425
        %v439 = vpop.f32.mrf.mxu0
        %v440 = vadd.f32 0.0, %v439
        %v441 = vpop.f32.mrf.mxu0
        %442 = vdwg.mxu0
        %v443 = vsel %vm292, %v440, -inf
        %444 = vmax.xlane.f32.xlu0 %v443
        %v445 = vpop.xlane.xlu0 %444
        %v446 = vsub.f32 %v440, %v445
        %v447 = vmul.f32 %v446, 1.442695
        %v448 = vpow.pop %v447
        %v449 = vsel %vm292, %v448, 0.0
        %450 = vadd.xlane.f32.xlu0 %v449
        %v451 = vpop.xlane.xlu0 %450
        %v452 = vpack.c.bf16 %v448, %v448
        %453 = vrot.lane.b32.xlu0 %v419, 48
        %v454 = vpop.permute.xlu0 %453
        %v456 = vsel %vm292, %v452, 0
        %v459 = vsel %vm327, %v454, 0
        %461 = vmatpush.bf16.msra.mxu0 0
        %462 = vmatpush.bf16.msra.mxu0 0
        %463 = vmatpush.bf16.msra.mxu0 0
        %464 = vmatpush.bf16.msra.mxu0 0
        %465 = vmatpush.bf16.msra.mxu0 0
        %466 = vmatpush.bf16.msra.mxu0 0
        %467 = vmatpush.bf16.msra.mxu0 0
        %468 = vmatpush.bf16.msra.mxu0 %v459
        %469 = vmatmul.bf16.gmra.mxu0 %v456
        %v470 = vpop.f32.mrf.mxu0
        %v471 = vadd.f32 0.0, %v470
        %v472 = vpop.f32.mrf.mxu0
        %473 = vdwg.mxu0
        %v474 = vrcp.pop %v451
        %v475 = vmul.f32 %v471, %v474
        %v476 = vpack.c.bf16 %v475, %v475
        %478 = vrot.lane.b32.xlu0 %v476, 16
        %v479 = vpop.permute.xlu0 %478
        %vm481 = vcmask 191616
        %482 = vst.msk [vmem:[#allocation3] sm:$0xf] %vm481, %v479
        %v483 = vld [vmem:[#allocation2] sm:$0xf]
        %v485 = vunpack.c.l.b16 %v483
        %v486 = vpack.c.b16 %v485, %v485
        %487 = vrot.lane.b32.xlu0 %v486, 104
        %v488 = vpop.permute.xlu0 %487
        %489 = vrot.lane.b32.xlu0 %v486, 72
        %v490 = vpop.permute.xlu0 %489
        %v492 = vsel %vm292, %v488, 0
        %v495 = vsel %vm292, %v490, 0
        %497 = vmatpush.bf16.xpose.msra.mxu0 0
        %498 = vmatpush.bf16.xpose.msra.mxu0 0
        %499 = vmatpush.bf16.xpose.msra.mxu0 0
        %500 = vmatpush.bf16.xpose.msra.mxu0 0
        %501 = vmatpush.bf16.xpose.msra.mxu0 0
        %502 = vmatpush.bf16.xpose.msra.mxu0 0
        %503 = vmatpush.bf16.xpose.msra.mxu0 0
        %504 = vmatpush.bf16.xpose.msra.mxu0 %v495
        %505 = vmatmul.bf16.gmra.mxu0 %v492
        %v506 = vpop.f32.mrf.mxu0
        %v507 = vadd.f32 0.0, %v506
        %v508 = vpop.f32.mrf.mxu0
        %509 = vdwg.mxu0
        %v510 = vsel %vm292, %v507, -inf
        %511 = vmax.xlane.f32.xlu0 %v510
        %v512 = vpop.xlane.xlu0 %511
        %v513 = vsub.f32 %v507, %v512
        %v514 = vmul.f32 %v513, 1.442695
        %v515 = vpow.pop %v514
        %v516 = vsel %vm292, %v515, 0.0
        %517 = vadd.xlane.f32.xlu0 %v516
        %v518 = vpop.xlane.xlu0 %517
        %v519 = vpack.c.bf16 %v515, %v515
        %520 = vrot.lane.b32.xlu0 %v486, 40
        %v521 = vpop.permute.xlu0 %520
        %v523 = vsel %vm292, %v519, 0
        %v526 = vsel %vm327, %v521, 0
        %528 = vmatpush.bf16.msra.mxu0 0
        %529 = vmatpush.bf16.msra.mxu0 0
        %530 = vmatpush.bf16.msra.mxu0 0
        %531 = vmatpush.bf16.msra.mxu0 0
        %532 = vmatpush.bf16.msra.mxu0 0
        %533 = vmatpush.bf16.msra.mxu0 0
        %534 = vmatpush.bf16.msra.mxu0 0
        %535 = vmatpush.bf16.msra.mxu0 %v526
        %536 = vmatmul.bf16.gmra.mxu0 %v523
        %v537 = vpop.f32.mrf.mxu0
        %v538 = vadd.f32 0.0, %v537
        %v539 = vpop.f32.mrf.mxu0
        %540 = vdwg.mxu0
        %v541 = vrcp.pop %v518
        %v542 = vmul.f32 %v538, %v541
        %v543 = vpack.c.bf16 %v542, %v542
        %545 = vrot.lane.b32.xlu0 %v543, 24
        %v546 = vpop.permute.xlu0 %545
        %vm548 = vcmask 257216
        %549 = vst.msk [vmem:[#allocation3] sm:$0xf] %vm548, %v546
        %v550 = vld [vmem:[#allocation3] sm:$0xf]
        %v551 = vld [vmem:[#allocation9] sm:$0xf]
        %v552 = vld [vmem:[#allocation9 + $0x4] sm:$0xf]
        %v553 = vld [vmem:[#allocation9 + $0x8] sm:$0xf]
        %v554 = vld [vmem:[#allocation9 + $0xc] sm:$0xf]
        %v555 = vld [vmem:[%s3] sm:$0x1]
        %v557 = vperm.slane %v555, 0
        %v563 = vunpack.c.l.b16 %v551
        %v564 = vunpack.c.l.b16 %v552
        %v565 = vunpack.c.l.b16 %v553
        %v566 = vunpack.c.l.b16 %v554
        %v567 = vpack.c.b16 %v564, %v563
        %v568 = vpack.c.b16 %v566, %v565
        %v572 = vsel %vm266, %v550, 0
        %574 = vmatpush.bf16.msra.mxu0 0
        %575 = vmatpush.bf16.msra.mxu0 0
        %576 = vmatpush.bf16.msra.mxu0 0
        %577 = vmatpush.bf16.msra.mxu0 0
        %578 = vmatpush.bf16.msra.mxu0 0
        %579 = vmatpush.bf16.msra.mxu0 0
        %580 = vmatpush.bf16.msra.mxu0 %v568
        %581 = vmatpush.bf16.msra.mxu0 %v567
        %582 = vmatmul.bf16.gmra.mxu0 %v572
        %v583 = vpop.f32.mrf.mxu0
        %v584 = vadd.f32 %v557, %v583
        %v585 = vpop.f32.mrf.mxu0
        %586 = vdwg.mxu0
        %587 = vst.msk [vmem:[%s247] sm:$0xff] %vm266, %v584
        %s588 = sand.u32 %s119, 1
        %s589 = scalar_lea.sflag [#allocation6], %s588
        %s590 = sand.u32 %s119, 1
        %s591 = smul.addr %s590, 8
        %s592 = scalar_lea.vmem [#allocation10], %s591
        // Predicated region
        $region49: #{tpu_custom_call.1} parent=35 // pred_check
          %p593 = pneg %p129
        $region50: #{tpu_custom_call.1} parent=35 // pred_check_branch
          %595 = sbr.rel (%p593) target = $region52
        $region51: #{tpu_custom_call.1} parent=35 // pred_region
          %597 = vsyncadd %s589, 0
          %s598 = smul.addr %s22, 8
          %s599 = scalar_lea.hbm %s4, %s598
          %s601 = sshll.u32 %s592, 4
          %s602 = int_to_ptr.vmem [resolvable:$true] %s601
          %s603 = sshll.u32 %s599, 4
          %s604 = int_to_ptr.hbm [resolvable:$true] %s603
          %606 = dma.vmem_to_hbm [thread:$0]  %s602, 128, %s604, %s589
        $region52: #{tpu_custom_call.1} parent=35 // pred_fallthru
          _
      $region36: #{tpu_custom_call.1} parent=5 // pred_fallthru
        _
      %p607 = scmp.le.s32.totalorder 2, %s17
      // Predicated region
      $region53: #{tpu_custom_call.1} parent=5 // pred_check
        %p608 = pneg %p607
      $region54: #{tpu_custom_call.1} parent=5 // pred_check_branch
        %610 = sbr.rel (%p608) target = $region56
      $region55: #{tpu_custom_call.1} parent=5 // pred_region
        %s611 = ssub.s32 %s17, 2
        // Predicated region
        $region57: #{tpu_custom_call.1} parent=55 // pred_check
          %p612 = pneg %p135
        $region58: #{tpu_custom_call.1} parent=55 // pred_check_branch
          %614 = sbr.rel (%p612) target = $region60
        $region59: #{tpu_custom_call.1} parent=55 // pred_region
          %s615 = sand.u32 %s120, 1
          %s616 = scalar_lea.sflag [#allocation6], %s615
          %s617 = sand.u32 %s120, 1
          %s618 = smul.addr %s617, 8
          %s619 = scalar_lea.vmem [#allocation10], %s618
          %621 = dma.done %s616, 128
        $region60: #{tpu_custom_call.1} parent=55 // pred_fallthru
          _
      $region56: #{tpu_custom_call.1} parent=5 // pred_fallthru
        _
    $region6: #{tpu_custom_call.1} parent=1 // loop_footer
      %s21 = sadd.s32 1, %s17
    $region7: #{tpu_custom_call.1} parent=1 // loop_footer_branch
      %16 = sbr.rel target = $region3
    $region8: #{tpu_custom_call.1} parent=1 // loop_exit
      _
    %622 = vsyncpa [#allocation5], 1
    %s623 = scalar_lea.sflag [#allocation5], 1
    %624 = vsyncpa %s623, 1
    %625 = vsyncpa [#allocation8], 1
    %626 = vsyncpa [#allocation6], 1
    %s627 = scalar_lea.sflag [#allocation6], 1
    %628 = vsyncpa %s627, 1

</llo_original>
